<compile_context>
chip_gen: v7x
topology: tpu7x:2x2x1
jax: 0.10.0
libtpu: 0.0.40
codegen_flags: <defaults>
</compile_context>

<pallas_src>
import functools

import jax
import jax.numpy as jnp
from jax.experimental import pallas as pl
from jax.experimental.pallas import tpu as pltpu


# --------------------------------------------------------------------------- #
# Kernel
# --------------------------------------------------------------------------- #
def _matmul_bias_row0_kernel(x_ref, w_ref, b_ref, o_ref):
    # Grid = (M tiles, N tiles, K steps); K is the last ("arbitrary") axis.
    # Every pl.program_id read happens here, at the top level of the body
    # (never inside a pl.when) -- see header comment.
    i = pl.program_id(0)                      # M-tile index
    k = pl.program_id(2)                      # K step
    nk = pl.num_programs(2)

    is_first_k = k == 0
    is_last_k = k == nk - 1
    # Bias goes only to global row 0, which always lives in M-tile i == 0.
    add_bias = jnp.logical_and(is_last_k, i == 0)

    @pl.when(is_first_k)
    def _():
        o_ref[...] = jnp.zeros_like(o_ref)

    # o_ref (f32) doubles as the accumulator: its index_map ignores k, so the
    # block stays resident in VMEM across the whole K reduction.
    o_ref[...] += jnp.dot(
        x_ref[...], w_ref[...], preferred_element_type=jnp.float32
    )

    @pl.when(add_bias)
    def _():
        o_ref[0:1, :] += b_ref[...].astype(jnp.float32)


# --------------------------------------------------------------------------- #
# Tiling helpers
# --------------------------------------------------------------------------- #
_VMEM_WORKSET_BUDGET = 24 * 1024 * 1024   # double-buffered pipeline bytes


def _round_up(x: int, m: int) -> int:
    return (x + m - 1) // m * m


def _cdiv(a: int, b: int) -> int:
    return -(-a // b)


def _balanced_tile(dim: int, align: int, cap: int) -> int:
    """Aligned tile <= cap chosen so round_up(dim, tile) stays close to dim."""
    dim_a = _round_up(dim, align)
    if dim_a <= cap:
        return dim_a
    n_tiles = _cdiv(dim_a, cap)
    return _round_up(_cdiv(dim_a, n_tiles), align)


def _choose_tiles(M: int, K: int, N: int, itemsize: int):
    # Sublane alignment depends on element width (f32: 8, bf16: 16, int8: 32).
    m_align = 8 * max(1, 4 // itemsize)
    # Lane / contraction alignment: 256 when the dim is big enough (v6e/v7x
    # MXU is 2x256x256; 256 also guarantees unmasked lane-dense stores),
    # 128 as the fallback for small dims (v5e-native).
    n_align = 256 if N > 128 else 128
    k_align = 256 if K > 128 else 128

    cap_mn = 512  # keeps the double-buffered working set at a few MiB
    tm = _balanced_tile(M, m_align, _round_up(cap_mn, m_align))
    tn = _balanced_tile(N, n_align, _round_up(cap_mn, n_align))

    # tk: as large as the VMEM budget allows, ideally the whole (padded) K, so
    # the accumulator RMW per K step is amortised over more MXU work.
    fixed = 2 * tm * tn * 4 + 2 * tn * 4            # output blocks (f32) + bias
    per_k = 2 * (tm + tn) * itemsize                # x + w double buffers
    tk_budget = max(k_align, (_VMEM_WORKSET_BUDGET - fixed) // per_k)
    tk_cap = max(k_align, tk_budget // k_align * k_align)
    tk = _balanced_tile(K, k_align, tk_cap)

    # Keep the parallel (M, N) grid at least 2 tiles wide when possible so
    # v7x's second TensorCore is not idle (no effect on single-TC v5e/v6e).
    if _round_up(M, tm) // tm == 1 and _round_up(N, tn) // tn == 1:
        if tn >= 2 * n_align:
            tn //= 2
        elif tm >= 2 * m_align:
            tm = _round_up(_cdiv(tm, 2), m_align)

    return tm, tn, tk


# --------------------------------------------------------------------------- #
# pallas_call wrapper
# --------------------------------------------------------------------------- #
@functools.partial(jax.jit, static_argnames=("tm", "tn", "tk"))
def _linear_padded(x_p, w_p, b_p, *, tm, tn, tk):
    Mp, Kp = x_p.shape
    _, Np = w_p.shape
    gm, gn, gk = Mp // tm, Np // tn, Kp // tk

    # VMEM footprint of the pipeline (double-buffered inputs + resident output).
    workset = (2 * tm * tk + 2 * tk * tn) * x_p.dtype.itemsize \
        + (2 * tm * tn + 2 * tn) * 4
    vmem_limit = min(48 * 1024 * 1024,
                     max(32 * 1024 * 1024, int(workset * 1.5)))

    flops = 2 * Mp * Np * Kp
    bytes_accessed = (
        gn * Mp * Kp * x_p.dtype.itemsize       # x re-read per N tile
        + gm * Kp * Np * w_p.dtype.itemsize     # w re-read per M tile
        + gm * Np * b_p.dtype.itemsize          # bias stream (tiny)
        + Mp * Np * 4                           # output write
    )

    return pl.pallas_call(
        _matmul_bias_row0_kernel,
        out_shape=jax.ShapeDtypeStruct((Mp, Np), jnp.float32),
        grid_spec=pltpu.PrefetchScalarGridSpec(
            num_scalar_prefetch=0,
            grid=(gm, gn, gk),
            in_specs=[
                pl.BlockSpec((tm, tk), lambda i, j, k: (i, k)),  # x tile
                pl.BlockSpec((tk, tn), lambda i, j, k: (k, j)),  # weight tile
                pl.BlockSpec((1, tn), lambda i, j, k: (0, j)),   # bias slice
            ],
            out_specs=pl.BlockSpec((tm, tn), lambda i, j, k: (i, j)),
        ),
        compiler_params=pltpu.CompilerParams(
            dimension_semantics=("parallel", "parallel", "arbitrary"),
            vmem_limit_bytes=vmem_limit,
        ),
        cost_estimate=pl.CostEstimate(
            flops=flops, transcendentals=0, bytes_accessed=bytes_accessed
        ),
    )(x_p, w_p, b_p)


def linear_first_row_bias(x: jax.Array, weight: jax.Array, bias: jax.Array) -> jax.Array:
    """y = x @ weight with bias added only to row 0 (the module's semantics).

    `weight` is [in_features, out_features] (i.e. layer.weight.data.T).
    In a persistent layer, pad weight/bias once at construction instead of per
    call; here the pads are skipped whenever the dims are already aligned.
    """
    M, K = x.shape
    K2, N = weight.shape
    assert K == K2, "in_features mismatch"
    assert bias.shape == (N,), "bias shape mismatch"

    itemsize = jnp.dtype(x.dtype).itemsize
    tm, tn, tk = _choose_tiles(M, K, N, itemsize)
    Mp, Kp, Np = _round_up(M, tm), _round_up(K, tk), _round_up(N, tn)

    x_p = x if (Mp == M and Kp == K) else jnp.pad(x, ((0, Mp - M), (0, Kp - K)))
    w_p = weight if (Kp == K and Np == N) else jnp.pad(
        weight, ((0, Kp - K), (0, Np - N)))
    b2 = bias.reshape(1, N)
    b_p = b2 if Np == N else jnp.pad(b2, ((0, 0), (0, Np - N)))

    y_p = _linear_padded(x_p, w_p, b_p, tm=tm, tn=tn, tk=tk)
    y = y_p if (Mp == M and Np == N) else y_p[:M, :N]
    return y.astype(x.dtype)


if __name__ == "__main__":
    # Deterministic synthetic parameters / inputs (shapes implied by nn.Linear).
    key = jax.random.PRNGKey(0)
    k_x, k_w, k_b = jax.random.split(key, 3)

    batch, in_features, out_features = 8, 32, 16

    x = jax.random.normal(k_x, (batch, in_features), dtype=jnp.float32)
    # weight corresponds to `layer.weight.data.T` -> [in_features, out_features]
    weight = jax.random.normal(k_w, (in_features, out_features), dtype=jnp.float32) * 0.1
    bias = jax.random.normal(k_b, (out_features,), dtype=jnp.float32)

    y = jax.block_until_ready(linear_first_row_bias(x, weight, bias))

    # Pure-JAX reference of the exact PyTorch semantics.
    y_ref = (x @ weight).at[0].add(bias)
    assert y.shape == y_ref.shape, "shape mismatch vs reference"
    assert jnp.allclose(y, y_ref, atol=1e-5, rtol=1e-5), "mismatch vs reference"

    print("KERNEL_OK")
</pallas_src>

<mosaic_0001>
module attributes {stable_mosaic.version = 11 : i64} {
  func.func @_matmul_bias_row0_kernel(%arg0: i32, %arg1: i32, %arg2: i32, %arg3: memref<8x128xf32, #tpu.memory_space<vmem>>, %arg4: memref<128x128xf32, #tpu.memory_space<vmem>>, %arg5: memref<1x128xf32, #tpu.memory_space<vmem>>, %arg6: memref<8x128xf32, #tpu.memory_space<vmem>>) attributes {dimension_semantics = [#tpu.dimension_semantics<parallel>, #tpu.dimension_semantics<parallel>, #tpu.dimension_semantics<arbitrary>], iteration_bounds = array<i64: 1, 1, 1>, scalar_prefetch = 0 : i64, scratch_operands = 0 : i64, tpu.core_type = #tpu.core_type<tc>, window_params = [{transform_indices = @transform_0, window_bounds = array<i64: 8, 128>}, {transform_indices = @transform_1, window_bounds = array<i64: 128, 128>}, {transform_indices = @transform_2, window_bounds = array<i64: 1, 128>}, {transform_indices = @transform_3, window_bounds = array<i64: 8, 128>}]} {
    %c0_i32 = arith.constant 0 : i32
    %0 = arith.cmpi eq, %arg2, %c0_i32 : i32
    %c0_i32_0 = arith.constant 0 : i32
    %1 = arith.cmpi eq, %arg2, %c0_i32_0 : i32
    %c0_i32_1 = arith.constant 0 : i32
    %2 = arith.cmpi eq, %arg0, %c0_i32_1 : i32
    %3 = arith.andi %1, %2 : i1
    %4 = arith.extui %0 : i1 to i32
    %c0_i32_2 = arith.constant 0 : i32
    %5 = arith.cmpi ne, %4, %c0_i32_2 : i32
    scf.if %5 {
      %cst_11 = arith.constant 0.000000e+00 : f32
      %14 = vector.broadcast %cst_11 : f32 to vector<8x128xf32>
      %c0_12 = arith.constant 0 : index
      %c0_13 = arith.constant 0 : index
      %15 = vector.load %arg6[%c0_12, %c0_13] : memref<8x128xf32, #tpu.memory_space<vmem>>, vector<8x128xf32>
      tpu.vector_store %arg6[%c0_12, %c0_13], %14 {strides = array<i32>} : memref<8x128xf32, #tpu.memory_space<vmem>>, vector<8x128xf32>,
    } else {
    }
    %c0 = arith.constant 0 : index
    %c0_3 = arith.constant 0 : index
    %6 = vector.load %arg6[%c0, %c0_3] : memref<8x128xf32, #tpu.memory_space<vmem>>, vector<8x128xf32>
    %c0_4 = arith.constant 0 : index
    %c0_5 = arith.constant 0 : index
    %7 = vector.load %arg3[%c0_4, %c0_5] : memref<8x128xf32, #tpu.memory_space<vmem>>, vector<8x128xf32>
    %c0_6 = arith.constant 0 : index
    %c0_7 = arith.constant 0 : index
    %8 = vector.load %arg4[%c0_6, %c0_7] : memref<128x128xf32, #tpu.memory_space<vmem>>, vector<128x128xf32>
    %cst = arith.constant dense<0.000000e+00> : vector<8x128xf32>
    %9 = tpu.matmul %7, %8, %cst {dimension_numbers = #tpu.dot_dimension_numbers<[1], [0], [0], [1], [0, 0, 1, 1], [], []>} : vector<8x128xf32>, vector<128x128xf32>, vector<8x128xf32> -> vector<8x128xf32>
    %10 = arith.addf %6, %9 : vector<8x128xf32>
    %c0_8 = arith.constant 0 : index
    %c0_9 = arith.constant 0 : index
    %11 = vector.load %arg6[%c0_8, %c0_9] : memref<8x128xf32, #tpu.memory_space<vmem>>, vector<8x128xf32>
    tpu.vector_store %arg6[%c0_8, %c0_9], %10 {strides = array<i32>} : memref<8x128xf32, #tpu.memory_space<vmem>>, vector<8x128xf32>,
    %12 = arith.extui %3 : i1 to i32
    %c0_i32_10 = arith.constant 0 : i32
    %13 = arith.cmpi ne, %12, %c0_i32_10 : i32
    scf.if %13 {
      %c0_11 = arith.constant 0 : index
      %c0_12 = arith.constant 0 : index
      %14 = vector.load %arg6[%c0_11, %c0_12] : memref<8x128xf32, #tpu.memory_space<vmem>>, vector<1x128xf32>
      %c0_13 = arith.constant 0 : index
      %c0_14 = arith.constant 0 : index
      %15 = vector.load %arg5[%c0_13, %c0_14] : memref<1x128xf32, #tpu.memory_space<vmem>>, vector<1x128xf32>
      %16 = arith.addf %14, %15 : vector<1x128xf32>
      %c0_15 = arith.constant 0 : index
      %c0_16 = arith.constant 0 : index
      %17 = vector.load %arg6[%c0_15, %c0_16] : memref<8x128xf32, #tpu.memory_space<vmem>>, vector<1x128xf32>
      tpu.vector_store %arg6[%c0_15, %c0_16], %16 {strides = array<i32>} : memref<8x128xf32, #tpu.memory_space<vmem>>, vector<1x128xf32>,
    } else {
    }
    return
  }
  func.func @transform_0(%arg0: i32, %arg1: i32, %arg2: i32) -> (i32, i32) {
    %c0_i32 = arith.constant 0 : i32
    return %arg0, %arg2 : i32, i32
  }
  func.func @transform_1(%arg0: i32, %arg1: i32, %arg2: i32) -> (i32, i32) {
    %c0_i32 = arith.constant 0 : i32
    return %arg2, %arg1 : i32, i32
  }
  func.func @transform_2(%arg0: i32, %arg1: i32, %arg2: i32) -> (i32, i32) {
    %c0_i32 = arith.constant 0 : i32
    %c0_i32_0 = arith.constant 0 : i32
    return %c0_i32, %arg1 : i32, i32
  }
  func.func @transform_3(%arg0: i32, %arg1: i32, %arg2: i32) -> (i32, i32) {
    %c0_i32 = arith.constant 0 : i32
    return %arg0, %arg1 : i32, i32
  }
}

</mosaic_0001>

<llo_original>
// kernel: _linear_padded.1
$region0: #{_linear_padded.1}
  #allocation0 [shape = 'u32[]', space=smem, size = 0x4, offset = 0x4, fixed_abs, tag = 'smem constant byte address 0x4 - core index']
  #allocation1 [shape = 'u32[144,128]{1,0:T(1,128)}', space=vmem, size = 0x12000, scoped, tag = 'internal scratch']
  %s0 = inlined_call_operand.hbm [shape: f32[8,128], index: 0, kind: input, shape index: {}]
  %s1 = inlined_call_operand.hbm [shape: f32[128,128], index: 1, kind: input, shape index: {}]
  %s2 = inlined_call_operand.vmem [shape: f32[1,128], index: 2, kind: input, shape index: {}]
  %s3 = inlined_call_operand.hbm [shape: f32[8,128], index: 3, kind: output, shape index: {}]
  %s4 = sld [smem:[#allocation0]]
  $region38: #{_linear_padded.1} parent=0
    _
  %s6 = ssub.s32 1, %s4
  %s7 = scalar_select 0, %s6, %s4
  $region1: #{_linear_padded.1} parent=0
    #allocation2 [shape = 'u8[4096]{0}', space=vmem, size = 0x1000, scoped, tag = 'input window, operand 0, single buffered']
    #allocation3 [shape = 's32[1]{0}', space=sflag, size = 0x4, scoped, tag = 'scoped memory for _linear_padded.1']
    #allocation4 [shape = 's32[1]{0}', space=sflag, size = 0x4, scoped, tag = 'scoped memory for _linear_padded.1']
    #allocation5 [shape = 'u8[65536]{0}', space=vmem, size = 0x10000, scoped, tag = 'input window, operand 1, single buffered']
    #allocation6 [shape = 's32[1]{0}', space=sflag, size = 0x4, scoped, tag = 'scoped memory for _linear_padded.1']
    #allocation7 [shape = 'u8[4096]{0}', space=vmem, size = 0x1000, scoped, tag = 'output window, operand 0, single buffered']
    %8 = vsyncpa [#allocation3], 0
    %9 = vsyncpa [#allocation6], 0
    %10 = vsyncpa [#allocation4], 0
    // Predicated region
    $region2: #{_linear_padded.1} parent=1 // pred_check
      _
    $region3: #{_linear_padded.1} parent=1 // pred_check_branch
      %12 = sbr.rel (0) target = $region5
    $region4: #{_linear_padded.1} parent=1 // pred_region
      %s14 = ssub.s32 128, 128
      %15 = vsyncadd [#allocation3], %s14
      %s17 = sshll.u32 [#allocation2], 4
      %s18 = int_to_ptr.vmem [resolvable:$true] %s17
      %20 = dma.hbm_to_vmem [thread:$0]  %s0, 128, %s18, [#allocation3]
    $region5: #{_linear_padded.1} parent=1 // pred_fallthru
      _
    // Predicated region
    $region6: #{_linear_padded.1} parent=1 // pred_check
      _
    $region7: #{_linear_padded.1} parent=1 // pred_check_branch
      %22 = sbr.rel (0) target = $region9
    $region8: #{_linear_padded.1} parent=1 // pred_region
      %s24 = ssub.s32 2048, 2048
      %25 = vsyncadd [#allocation6], %s24
      %s26 = sshll.u32 [#allocation5], 4
      %s27 = int_to_ptr.vmem [resolvable:$true] %s26
      %32 = dma.hbm_to_vmem [thread:$0]  %s1, 2048, %s27, [#allocation6], 128, 128, 8
    $region9: #{_linear_padded.1} parent=1 // pred_fallthru
      _
    // Predicated region
    $region10: #{_linear_padded.1} parent=1 // pred_check
      _
    $region11: #{_linear_padded.1} parent=1 // pred_check_branch
      %34 = sbr.rel (0) target = $region13
    $region12: #{_linear_padded.1} parent=1 // pred_region
      _
    $region13: #{_linear_padded.1} parent=1 // pred_fallthru
      _
    // Predicated region
    $region14: #{_linear_padded.1} parent=1 // pred_check
      _
    $region15: #{_linear_padded.1} parent=1 // pred_check_branch
      %36 = sbr.rel (0) target = $region17
    $region16: #{_linear_padded.1} parent=1 // pred_region
      %37 = dma.done [#allocation3], 128
    $region17: #{_linear_padded.1} parent=1 // pred_fallthru
      _
    // Predicated region
    $region18: #{_linear_padded.1} parent=1 // pred_check
      _
    $region19: #{_linear_padded.1} parent=1 // pred_check_branch
      %39 = sbr.rel (0) target = $region21
    $region20: #{_linear_padded.1} parent=1 // pred_region
      %40 = dma.done [#allocation6], 2048
    $region21: #{_linear_padded.1} parent=1 // pred_fallthru
      _
    %p41 = scmp.eq.s32.totalorder 0, 0
    %p42 = scmp.eq.s32.totalorder 0, 0
    %p43 = pnand %p41, %p42
    %p44 = pneg %p43
    // Predicated region
    $region22: #{_linear_padded.1} parent=1 // pred_check
      %p45 = pneg %p41
    $region23: #{_linear_padded.1} parent=1 // pred_check_branch
      %47 = sbr.rel (%p45) target = $region25
    $region24: #{_linear_padded.1} parent=1 // pred_region
      %48 = vst [vmem:[#allocation7] sm:$0xff] 0.0
    $region25: #{_linear_padded.1} parent=1 // pred_fallthru
      _
    %v49 = vld [vmem:[#allocation7] sm:$0xff]
    %v50 = vld [vmem:[#allocation2] sm:$0xff]
    %v51 = vld [vmem:[#allocation5] sm:$0xff]
    %v52 = vld [vmem:[#allocation5 + $0x8] sm:$0xff]
    %v53 = vld [vmem:[#allocation5 + $0x10] sm:$0xff]
    %v54 = vld [vmem:[#allocation5 + $0x18] sm:$0xff]
    %v55 = vld [vmem:[#allocation5 + $0x20] sm:$0xff]
    %v56 = vld [vmem:[#allocation5 + $0x28] sm:$0xff]
    %v57 = vld [vmem:[#allocation5 + $0x30] sm:$0xff]
    %v58 = vld [vmem:[#allocation5 + $0x38] sm:$0xff]
    %v59 = vld [vmem:[#allocation5 + $0x40] sm:$0xff]
    %v60 = vld [vmem:[#allocation5 + $0x48] sm:$0xff]
    %v61 = vld [vmem:[#allocation5 + $0x50] sm:$0xff]
    %v62 = vld [vmem:[#allocation5 + $0x58] sm:$0xff]
    %v63 = vld [vmem:[#allocation5 + $0x60] sm:$0xff]
    %v64 = vld [vmem:[#allocation5 + $0x68] sm:$0xff]
    %v65 = vld [vmem:[#allocation5 + $0x70] sm:$0xff]
    %v66 = vld [vmem:[#allocation5 + $0x78] sm:$0xff]
    %67 = vmatprep.subr.mxu0 0.0
    %68 = vmatpush1.msra.mxu0 %v51
    %69 = vmatprep.subr.mxu0 0.0
    %70 = vmatpush1.msra.mxu0 %v52
    %71 = vmatprep.subr.mxu0 0.0
    %72 = vmatpush1.msra.mxu0 %v53
    %73 = vmatprep.subr.mxu0 0.0
    %74 = vmatpush1.msra.mxu0 %v54
    %75 = vmatprep.subr.mxu0 0.0
    %76 = vmatpush1.msra.mxu0 %v55
    %77 = vmatprep.subr.mxu0 0.0
    %78 = vmatpush1.msra.mxu0 %v56
    %79 = vmatprep.subr.mxu0 0.0
    %80 = vmatpush1.msra.mxu0 %v57
    %81 = vmatprep.subr.mxu0 0.0
    %82 = vmatpush1.msra.mxu0 %v58
    %83 = vmatprep.subr.mxu0 0.0
    %84 = vmatpush1.msra.mxu0 %v59
    %85 = vmatprep.subr.mxu0 0.0
    %86 = vmatpush1.msra.mxu0 %v60
    %87 = vmatprep.subr.mxu0 0.0
    %88 = vmatpush1.msra.mxu0 %v61
    %89 = vmatprep.subr.mxu0 0.0
    %90 = vmatpush1.msra.mxu0 %v62
    %91 = vmatprep.subr.mxu0 0.0
    %92 = vmatpush1.msra.mxu0 %v63
    %93 = vmatprep.subr.mxu0 0.0
    %94 = vmatpush1.msra.mxu0 %v64
    %95 = vmatprep.subr.mxu0 0.0
    %96 = vmatpush1.msra.mxu0 %v65
    %97 = vmatprep.subr.mxu0 0.0
    %98 = vmatpush1.msra.mxu0 %v66
    %99 = vmatprep.subr.mxu0 0.0
    %100 = vmatpush1.msra.mxu0 0.0
    %101 = vmatprep.subr.mxu0 0.0
    %102 = vmatpush1.msra.mxu0 0.0
    %103 = vmatprep.subr.mxu0 0.0
    %104 = vmatpush1.msra.mxu0 0.0
    %105 = vmatprep.subr.mxu0 0.0
    %106 = vmatpush1.msra.mxu0 0.0
    %107 = vmatprep.subr.mxu0 0.0
    %108 = vmatpush1.msra.mxu0 0.0
    %109 = vmatprep.subr.mxu0 0.0
    %110 = vmatpush1.msra.mxu0 0.0
    %111 = vmatprep.subr.mxu0 0.0
    %112 = vmatpush1.msra.mxu0 0.0
    %113 = vmatprep.subr.mxu0 0.0
    %114 = vmatpush1.msra.mxu0 0.0
    %115 = vmatprep.subr.mxu0 0.0
    %116 = vmatpush1.msra.mxu0 0.0
    %117 = vmatprep.subr.mxu0 0.0
    %118 = vmatpush1.msra.mxu0 0.0
    %119 = vmatprep.subr.mxu0 0.0
    %120 = vmatpush1.msra.mxu0 0.0
    %121 = vmatprep.subr.mxu0 0.0
    %122 = vmatpush1.msra.mxu0 0.0
    %123 = vmatprep.subr.mxu0 0.0
    %124 = vmatpush1.msra.mxu0 0.0
    %125 = vmatprep.subr.mxu0 0.0
    %126 = vmatpush1.msra.mxu0 0.0
    %127 = vmatprep.subr.mxu0 0.0
    %128 = vmatpush1.msra.mxu0 0.0
    %129 = vmatprep.subr.mxu0 0.0
    %130 = vmatpush1.msra.mxu0 0.0
    %131 = vmatprep.mubr.f32.mxu0 0.0
    %132 = vmatmul.mubr.f32.gmra.mrb[0].mxu0 %v50
    %v133 = vpop.f32.mrb[0].mxu0
    %v134 = vadd.f32 0.0, %v133
    %v135 = vpop.f32.mrb[0].mxu0
    %136 = vdwg.mxu0
    %v137 = vadd.f32 %v49, %v134
    %138 = vst [vmem:[#allocation7] sm:$0xff] %v137
    // Predicated region
    $region26: #{_linear_padded.1} parent=1 // pred_check
      _
    $region27: #{_linear_padded.1} parent=1 // pred_check_branch
      %140 = sbr.rel (%p43) target = $region29
    $region28: #{_linear_padded.1} parent=1 // pred_region
      %v141 = vld [vmem:[#allocation7] sm:$0x1]
      %v142 = vld [vmem:[%s2] sm:$0x1]
      %v143 = vadd.f32 %v141, %v142
      %144 = vst [vmem:[#allocation7] sm:$0x1] %v143
    $region29: #{_linear_padded.1} parent=1 // pred_fallthru
      _
    // Predicated region
    $region30: #{_linear_padded.1} parent=1 // pred_check
      _
    $region31: #{_linear_padded.1} parent=1 // pred_check_branch
      %146 = sbr.rel (0) target = $region33
    $region32: #{_linear_padded.1} parent=1 // pred_region
      %s148 = ssub.s32 128, 128
      %149 = vsyncadd [#allocation4], %s148
      %s151 = sshll.u32 [#allocation7], 4
      %s152 = int_to_ptr.vmem [resolvable:$true] %s151
      %154 = dma.vmem_to_hbm [thread:$0]  %s152, 128, %s3, [#allocation4]
    $region33: #{_linear_padded.1} parent=1 // pred_fallthru
      _
    // Predicated region
    $region34: #{_linear_padded.1} parent=1 // pred_check
      _
    $region35: #{_linear_padded.1} parent=1 // pred_check_branch
      %156 = sbr.rel (0) target = $region37
    $region36: #{_linear_padded.1} parent=1 // pred_region
      %157 = dma.done [#allocation4], 128
    $region37: #{_linear_padded.1} parent=1 // pred_fallthru
      _
    %158 = vsyncpa [#allocation3], 1
    %159 = vsyncpa [#allocation6], 1
    %160 = vsyncpa [#allocation4], 1

</llo_original>
